<compile_context>
chip_gen: v7x
topology: tpu7x:2x2x1
jax: 0.10.0
libtpu: 0.0.40
codegen_flags: <defaults>
</compile_context>

<pallas_src>
import functools

import numpy as np
import jax
import jax.numpy as jnp
from jax import lax
from jax.experimental import pallas as pl
from jax.experimental.pallas import tpu as pltpu

EPS = 1e-5       # BatchNorm1d default eps
LANE_PAD = 128   # lane-dense width for the tiny output projection


def _bn_relu(z, mean, var, gamma, beta):
    """BatchNorm (training-mode batch stats) + ReLU, all in f32."""
    return jnp.maximum((z - mean) * lax.rsqrt(var + EPS) * gamma + beta, 0.0)


def _bf16_dot(a_f32, b_bf16):
    """MXU matmul: bf16 operands, f32 accumulation."""
    return jnp.dot(a_f32.astype(jnp.bfloat16), b_bf16,
                   preferred_element_type=jnp.float32)


def fused_kernel(xi_ref, xs_ref, emb_ref, w_ref, wo_ref, vec_ref, o_ref):
    N = xi_ref.shape[0]          # full batch rows (ravel(data.x))
    M = xs_ref.shape[0]          # selected target rows
    V, E = emb_ref.shape

    # ---- packed small params: ONE (8,128) f32 block ------------------------
    vecs = vec_ref[...]                                     # single vreg load
    g0, bt0 = vecs[0:1, :E], vecs[1:2, :E]
    g1, bt1 = vecs[2:3, :E], vecs[3:4, :E]
    g2, bt2 = vecs[4:5, :E], vecs[5:6, :E]
    bo = vecs[6:7, :]                                       # (1, 128)

    emb = emb_ref[...]                                      # bf16 (V, E)
    w0, w1, w2 = w_ref[0], w_ref[1], w_ref[2]               # bf16 (E, E) each

    # ---- embedding lookup over ALL N rows (BN0 needs full-batch stats) -----
    oh_n = (xi_ref[...] ==
            lax.broadcasted_iota(jnp.int32, (N, V), 1)).astype(jnp.bfloat16)
    h = jnp.dot(oh_n, emb, preferred_element_type=jnp.float32)   # exact emb rows
    z0 = _bf16_dot(h, w0)                                        # (N, E) f32
    m0 = jnp.mean(z0, axis=0, keepdims=True)
    v0 = jnp.mean((z0 - m0) ** 2, axis=0, keepdims=True)         # biased var

    # ---- gather of the M target rows (indices precomputed in the wrapper) --
    oh_m = (xs_ref[...] ==
            lax.broadcasted_iota(jnp.int32, (M, V), 1)).astype(jnp.bfloat16)
    h_sel = jnp.dot(oh_m, emb, preferred_element_type=jnp.float32)
    z0s = _bf16_dot(h_sel, w0)                                   # == z0[ti] bitwise
    a0 = _bn_relu(z0s, m0, v0, g0, bt0)

    # ---- linear1 + bn1 + relu (stats over the M selected rows) -------------
    z1 = _bf16_dot(a0, w1)
    m1 = jnp.mean(z1, axis=0, keepdims=True)
    v1 = jnp.mean((z1 - m1) ** 2, axis=0, keepdims=True)
    a1 = _bn_relu(z1, m1, v1, g1, bt1)

    # ---- linear2 + bn2 + relu ----------------------------------------------
    z2 = _bf16_dot(a1, w2)
    m2 = jnp.mean(z2, axis=0, keepdims=True)
    v2 = jnp.mean((z2 - m2) ** 2, axis=0, keepdims=True)
    a2 = _bn_relu(z2, m2, v2, g2, bt2)

    # ---- linear_out into a lane-dense (M, 128) block ------------------------
    o_ref[...] = _bf16_dot(a2, wo_ref[...]) + bo


def _vmem():
    return pl.BlockSpec(memory_space=pltpu.MemorySpace.VMEM)


def prepare_params(params):
    """One-time packing / pre-casting (hoisted out of the per-call hot path)."""
    (emb, w0, b0, g0, bt0, w1, b1, g1, bt1,
     w2, b2, g2, bt2, wo, bo) = params
    del b0, b1, b2  # pre-BN biases cancel exactly in z - mean(z): dead math
    E = emb.shape[1]
    out_dim = wo.shape[1]

    w_stk = jnp.stack([w0, w1, w2]).astype(jnp.bfloat16)            # (3, E, E)
    wo_p = (jnp.zeros((E, LANE_PAD), jnp.float32)
            .at[:, :out_dim].set(wo).astype(jnp.bfloat16))          # (E, 128)

    vecs = jnp.zeros((8, LANE_PAD), jnp.float32)
    vecs = vecs.at[0, :E].set(g0[0]).at[1, :E].set(bt0[0])
    vecs = vecs.at[2, :E].set(g1[0]).at[3, :E].set(bt1[0])
    vecs = vecs.at[4, :E].set(g2[0]).at[5, :E].set(bt2[0])
    vecs = vecs.at[6, :out_dim].set(bo[0])                          # (8, 128)

    return {"emb": emb.astype(jnp.bfloat16), "w": w_stk,
            "wo": wo_p, "vec": vecs}


@functools.partial(jax.jit, static_argnames=("out_dim",))
def full_connected_forward(x_idx, target_indices, prepared, *, out_dim):
    """Pallas implementation of Full_connected_model.forward (training-mode BN)."""
    emb, w, wo, vec = prepared["emb"], prepared["w"], prepared["wo"], prepared["vec"]
    N = x_idx.size
    M = target_indices.shape[0]

    # index glue: pure metadata + a tiny (M,) int32 gather (clamps OOB, same
    # as the jnp.take / index_select reference semantics)
    xi_flat = jnp.ravel(x_idx).astype(jnp.int32)
    xi = xi_flat.reshape(N, 1)
    xi_sel = xi_flat[target_indices.astype(jnp.int32)].reshape(M, 1)

    out_p = pl.pallas_call(
        fused_kernel,
        out_shape=jax.ShapeDtypeStruct((M, LANE_PAD), jnp.float32),
        in_specs=[_vmem()] * 6,
        out_specs=_vmem(),
    )(xi, xi_sel, emb, w, wo, vec)

    return out_p[:, :out_dim]


def reference_forward(x_idx, target_indices, params):
    """Pure-JAX f32 reference with exact PyTorch semantics (biases included)."""
    (emb, w0, b0, g0, bt0, w1, b1, g1, bt1,
     w2, b2, g2, bt2, wo, bo) = params

    def bn_relu(z, g, bt):
        m = jnp.mean(z, axis=0, keepdims=True)
        v = jnp.mean((z - m) ** 2, axis=0, keepdims=True)
        return jnp.maximum((z - m) * lax.rsqrt(v + EPS) * g + bt, 0.0)

    h = jnp.take(emb, jnp.ravel(x_idx), axis=0)
    h = bn_relu(h @ w0 + b0, g0, bt0)
    h = jnp.take(h, target_indices, axis=0)
    h = bn_relu(h @ w1 + b1, g1, bt1)
    h = bn_relu(h @ w2 + b2, g2, bt2)
    return h @ wo + bo


def init_params(key, vocabulary_size, embedding_size, label_size):
    out_dim = 1 if label_size == 2 else label_size
    E = embedding_size
    ks = jax.random.split(key, 10)
    lim = 1.0 / np.sqrt(E)

    def linear(k, d_in, d_out):
        kw, kb = jax.random.split(k)
        w = jax.random.uniform(kw, (d_in, d_out), jnp.float32, -lim, lim)
        b = jax.random.uniform(kb, (1, d_out), jnp.float32, -lim, lim)
        return w, b

    emb = jax.random.normal(ks[0], (vocabulary_size, E), jnp.float32)
    w0, b0 = linear(ks[1], E, E)
    w1, b1 = linear(ks[2], E, E)
    w2, b2 = linear(ks[3], E, E)
    wo, bo = linear(ks[4], E, out_dim)
    # BatchNorm1d affine params: gamma=1, beta=0
    g0 = jnp.ones((1, E), jnp.float32); bt0 = jnp.zeros((1, E), jnp.float32)
    g1 = jnp.ones((1, E), jnp.float32); bt1 = jnp.zeros((1, E), jnp.float32)
    g2 = jnp.ones((1, E), jnp.float32); bt2 = jnp.zeros((1, E), jnp.float32)
    return (emb, w0, b0, g0, bt0, w1, b1, g1, bt1, w2, b2, g2, bt2, wo, bo)


if __name__ == "__main__":
    vocabulary_size = 100
    embedding_size = 32
    label_size = 3          # -> output_size = 3

    params = init_params(jax.random.PRNGKey(0), vocabulary_size,
                         embedding_size, label_size)
    prepared = prepare_params(params)        # one-time packing / bf16 pre-cast
    out_dim = params[13].shape[1]            # wo is (E, out_dim)

    k1, k2 = jax.random.split(jax.random.PRNGKey(0), 2)
    x_idx = jax.random.randint(k1, (8, 8), 0, vocabulary_size, jnp.int32)   # data.x
    target_indices = jax.random.randint(k2, (16,), 0, 64, jnp.int32)        # data.target_indices
    # TODO(synk): edge_index / teamplate_node_mask / edge_list are unpacked but
    #             unused by the PyTorch forward, so they are omitted here.

    out = jax.block_until_ready(
        full_connected_forward(x_idx, target_indices, prepared, out_dim=out_dim))

    ref = jax.block_until_ready(reference_forward(x_idx, target_indices, params))
    # bf16 MXU operands with f32 accumulation -> ~2e-2 tolerance vs f32 reference
    np.testing.assert_allclose(np.asarray(out), np.asarray(ref), rtol=2e-2, atol=2e-2)
    assert out.shape == (16, 3) and out.dtype == jnp.float32
    print("KERNEL_OK")
</pallas_src>

<mosaic_0001>
module attributes {stable_mosaic.version = 11 : i64} {
  func.func @fused_kernel(%arg0: memref<64x1xi32, #tpu.memory_space<vmem>>, %arg1: memref<16x1xi32, #tpu.memory_space<vmem>>, %arg2: memref<100x32xbf16, #tpu.memory_space<vmem>>, %arg3: memref<3x32x32xbf16, #tpu.memory_space<vmem>>, %arg4: memref<32x128xbf16, #tpu.memory_space<vmem>>, %arg5: memref<8x128xf32, #tpu.memory_space<vmem>>, %arg6: memref<16x128xf32, #tpu.memory_space<vmem>>) attributes {dimension_semantics = [], scalar_prefetch = 0 : i64, scratch_operands = 0 : i64, tpu.core_type = #tpu.core_type<tc>} {
    %c0 = arith.constant 0 : index
    %c0_0 = arith.constant 0 : index
    %0 = vector.load %arg5[%c0, %c0_0] : memref<8x128xf32, #tpu.memory_space<vmem>>, vector<8x128xf32>
    %1 = vector.extract_strided_slice %0 {offsets = [0, 0], sizes = [1, 32], strides = [1, 1]} : vector<8x128xf32> to vector<1x32xf32>
    %2 = vector.extract_strided_slice %0 {offsets = [1, 0], sizes = [1, 32], strides = [1, 1]} : vector<8x128xf32> to vector<1x32xf32>
    %3 = vector.extract_strided_slice %0 {offsets = [2, 0], sizes = [1, 32], strides = [1, 1]} : vector<8x128xf32> to vector<1x32xf32>
    %4 = vector.extract_strided_slice %0 {offsets = [3, 0], sizes = [1, 32], strides = [1, 1]} : vector<8x128xf32> to vector<1x32xf32>
    %5 = vector.extract_strided_slice %0 {offsets = [4, 0], sizes = [1, 32], strides = [1, 1]} : vector<8x128xf32> to vector<1x32xf32>
    %6 = vector.extract_strided_slice %0 {offsets = [5, 0], sizes = [1, 32], strides = [1, 1]} : vector<8x128xf32> to vector<1x32xf32>
    %7 = vector.extract_strided_slice %0 {offsets = [6, 0], sizes = [1, 128], strides = [1, 1]} : vector<8x128xf32> to vector<1x128xf32>
    %c0_1 = arith.constant 0 : index
    %c0_2 = arith.constant 0 : index
    %8 = vector.load %arg2[%c0_1, %c0_2] : memref<100x32xbf16, #tpu.memory_space<vmem>>, vector<100x32xbf16>
    %c0_3 = arith.constant 0 : index
    %c0_4 = arith.constant 0 : index
    %c0_5 = arith.constant 0 : index
    %9 = vector.load %arg3[%c0_3, %c0_4, %c0_5] : memref<3x32x32xbf16, #tpu.memory_space<vmem>>, vector<1x32x32xbf16>
    %10 = vector.shape_cast %9 : vector<1x32x32xbf16> to vector<32x32xbf16>
    %c1 = arith.constant 1 : index
    %c0_6 = arith.constant 0 : index
    %c0_7 = arith.constant 0 : index
    %11 = vector.load %arg3[%c1, %c0_6, %c0_7] : memref<3x32x32xbf16, #tpu.memory_space<vmem>>, vector<1x32x32xbf16>
    %12 = vector.shape_cast %11 : vector<1x32x32xbf16> to vector<32x32xbf16>
    %c2 = arith.constant 2 : index
    %c0_8 = arith.constant 0 : index
    %c0_9 = arith.constant 0 : index
    %13 = vector.load %arg3[%c2, %c0_8, %c0_9] : memref<3x32x32xbf16, #tpu.memory_space<vmem>>, vector<1x32x32xbf16>
    %14 = vector.shape_cast %13 : vector<1x32x32xbf16> to vector<32x32xbf16>
    %c0_10 = arith.constant 0 : index
    %c0_11 = arith.constant 0 : index
    %15 = vector.load %arg0[%c0_10, %c0_11] : memref<64x1xi32, #tpu.memory_space<vmem>>, vector<64x1xi32>
    %16 = tpu.iota {dimensions = array<i32: 1>} : vector<64x100xi32>
    %17 = vector.broadcast %15 : vector<64x1xi32> to vector<64x100xi32>
    %18 = arith.cmpi eq, %17, %16 : vector<64x100xi32>
    %19 = arith.extui %18 : vector<64x100xi1> to vector<64x100xi32>
    %20 = arith.sitofp %19 : vector<64x100xi32> to vector<64x100xf32>
    %21 = arith.truncf %20 : vector<64x100xf32> to vector<64x100xbf16>
    %cst = arith.constant dense<0.000000e+00> : vector<64x32xf32>
    %22 = tpu.matmul %21, %8, %cst {dimension_numbers = #tpu.dot_dimension_numbers<[1], [0], [0], [1], [0, 0, 1, 1], [], []>} : vector<64x100xbf16>, vector<100x32xbf16>, vector<64x32xf32> -> vector<64x32xf32>
    %23 = arith.truncf %22 : vector<64x32xf32> to vector<64x32xbf16>
    %cst_12 = arith.constant dense<0.000000e+00> : vector<64x32xf32>
    %24 = tpu.matmul %23, %10, %cst_12 {dimension_numbers = #tpu.dot_dimension_numbers<[1], [0], [0], [1], [0, 0, 1, 1], [], []>} : vector<64x32xbf16>, vector<32x32xbf16>, vector<64x32xf32> -> vector<64x32xf32>
    %cst_13 = arith.constant dense<0.000000e+00> : vector<32xf32>
    %25 = vector.multi_reduction <add>, %24, %cst_13 [0] : vector<64x32xf32> to vector<32xf32>
    %26 = vector.shape_cast %25 : vector<32xf32> to vector<1x32xf32>
    %cst_14 = arith.constant 6.400000e+01 : f32
    %27 = vector.broadcast %cst_14 : f32 to vector<1x32xf32>
    %28 = arith.divf %26, %27 : vector<1x32xf32>
    %29 = vector.broadcast %28 : vector<1x32xf32> to vector<64x32xf32>
    %30 = arith.subf %24, %29 : vector<64x32xf32>
    %31 = arith.mulf %30, %30 : vector<64x32xf32>
    %cst_15 = arith.constant dense<0.000000e+00> : vector<32xf32>
    %32 = vector.multi_reduction <add>, %31, %cst_15 [0] : vector<64x32xf32> to vector<32xf32>
    %33 = vector.shape_cast %32 : vector<32xf32> to vector<1x32xf32>
    %cst_16 = arith.constant 6.400000e+01 : f32
    %34 = vector.broadcast %cst_16 : f32 to vector<1x32xf32>
    %35 = arith.divf %33, %34 : vector<1x32xf32>
    %c0_17 = arith.constant 0 : index
    %c0_18 = arith.constant 0 : index
    %36 = vector.load %arg1[%c0_17, %c0_18] : memref<16x1xi32, #tpu.memory_space<vmem>>, vector<16x1xi32>
    %37 = tpu.iota {dimensions = array<i32: 1>} : vector<16x100xi32>
    %38 = vector.broadcast %36 : vector<16x1xi32> to vector<16x100xi32>
    %39 = arith.cmpi eq, %38, %37 : vector<16x100xi32>
    %40 = arith.extui %39 : vector<16x100xi1> to vector<16x100xi32>
    %41 = arith.sitofp %40 : vector<16x100xi32> to vector<16x100xf32>
    %42 = arith.truncf %41 : vector<16x100xf32> to vector<16x100xbf16>
    %cst_19 = arith.constant dense<0.000000e+00> : vector<16x32xf32>
    %43 = tpu.matmul %42, %8, %cst_19 {dimension_numbers = #tpu.dot_dimension_numbers<[1], [0], [0], [1], [0, 0, 1, 1], [], []>} : vector<16x100xbf16>, vector<100x32xbf16>, vector<16x32xf32> -> vector<16x32xf32>
    %44 = arith.truncf %43 : vector<16x32xf32> to vector<16x32xbf16>
    %cst_20 = arith.constant dense<0.000000e+00> : vector<16x32xf32>
    %45 = tpu.matmul %44, %10, %cst_20 {dimension_numbers = #tpu.dot_dimension_numbers<[1], [0], [0], [1], [0, 0, 1, 1], [], []>} : vector<16x32xbf16>, vector<32x32xbf16>, vector<16x32xf32> -> vector<16x32xf32>
    %46 = vector.broadcast %28 : vector<1x32xf32> to vector<16x32xf32>
    %47 = arith.subf %45, %46 : vector<16x32xf32>
    %cst_21 = arith.constant 9.99999974E-6 : f32
    %48 = vector.broadcast %cst_21 : f32 to vector<1x32xf32>
    %49 = arith.addf %35, %48 : vector<1x32xf32>
    %50 = math.rsqrt %49 : vector<1x32xf32>
    %51 = vector.broadcast %50 : vector<1x32xf32> to vector<16x32xf32>
    %52 = arith.mulf %47, %51 : vector<16x32xf32>
    %53 = vector.broadcast %1 : vector<1x32xf32> to vector<16x32xf32>
    %54 = arith.mulf %52, %53 : vector<16x32xf32>
    %55 = vector.broadcast %2 : vector<1x32xf32> to vector<16x32xf32>
    %56 = arith.addf %54, %55 : vector<16x32xf32>
    %cst_22 = arith.constant 0.000000e+00 : f32
    %57 = vector.broadcast %cst_22 : f32 to vector<16x32xf32>
    %58 = arith.maximumf %56, %57 : vector<16x32xf32>
    %59 = arith.truncf %58 : vector<16x32xf32> to vector<16x32xbf16>
    %cst_23 = arith.constant dense<0.000000e+00> : vector<16x32xf32>
    %60 = tpu.matmul %59, %12, %cst_23 {dimension_numbers = #tpu.dot_dimension_numbers<[1], [0], [0], [1], [0, 0, 1, 1], [], []>} : vector<16x32xbf16>, vector<32x32xbf16>, vector<16x32xf32> -> vector<16x32xf32>
    %cst_24 = arith.constant dense<0.000000e+00> : vector<32xf32>
    %61 = vector.multi_reduction <add>, %60, %cst_24 [0] : vector<16x32xf32> to vector<32xf32>
    %62 = vector.shape_cast %61 : vector<32xf32> to vector<1x32xf32>
    %cst_25 = arith.constant 1.600000e+01 : f32
    %63 = vector.broadcast %cst_25 : f32 to vector<1x32xf32>
    %64 = arith.divf %62, %63 : vector<1x32xf32>
    %65 = vector.broadcast %64 : vector<1x32xf32> to vector<16x32xf32>
    %66 = arith.subf %60, %65 : vector<16x32xf32>
    %67 = arith.mulf %66, %66 : vector<16x32xf32>
    %cst_26 = arith.constant dense<0.000000e+00> : vector<32xf32>
    %68 = vector.multi_reduction <add>, %67, %cst_26 [0] : vector<16x32xf32> to vector<32xf32>
    %69 = vector.shape_cast %68 : vector<32xf32> to vector<1x32xf32>
    %cst_27 = arith.constant 1.600000e+01 : f32
    %70 = vector.broadcast %cst_27 : f32 to vector<1x32xf32>
    %71 = arith.divf %69, %70 : vector<1x32xf32>
    %72 = vector.broadcast %64 : vector<1x32xf32> to vector<16x32xf32>
    %73 = arith.subf %60, %72 : vector<16x32xf32>
    %cst_28 = arith.constant 9.99999974E-6 : f32
    %74 = vector.broadcast %cst_28 : f32 to vector<1x32xf32>
    %75 = arith.addf %71, %74 : vector<1x32xf32>
    %76 = math.rsqrt %75 : vector<1x32xf32>
    %77 = vector.broadcast %76 : vector<1x32xf32> to vector<16x32xf32>
    %78 = arith.mulf %73, %77 : vector<16x32xf32>
    %79 = vector.broadcast %3 : vector<1x32xf32> to vector<16x32xf32>
    %80 = arith.mulf %78, %79 : vector<16x32xf32>
    %81 = vector.broadcast %4 : vector<1x32xf32> to vector<16x32xf32>
    %82 = arith.addf %80, %81 : vector<16x32xf32>
    %cst_29 = arith.constant 0.000000e+00 : f32
    %83 = vector.broadcast %cst_29 : f32 to vector<16x32xf32>
    %84 = arith.maximumf %82, %83 : vector<16x32xf32>
    %85 = arith.truncf %84 : vector<16x32xf32> to vector<16x32xbf16>
    %cst_30 = arith.constant dense<0.000000e+00> : vector<16x32xf32>
    %86 = tpu.matmul %85, %14, %cst_30 {dimension_numbers = #tpu.dot_dimension_numbers<[1], [0], [0], [1], [0, 0, 1, 1], [], []>} : vector<16x32xbf16>, vector<32x32xbf16>, vector<16x32xf32> -> vector<16x32xf32>
    %cst_31 = arith.constant dense<0.000000e+00> : vector<32xf32>
    %87 = vector.multi_reduction <add>, %86, %cst_31 [0] : vector<16x32xf32> to vector<32xf32>
    %88 = vector.shape_cast %87 : vector<32xf32> to vector<1x32xf32>
    %cst_32 = arith.constant 1.600000e+01 : f32
    %89 = vector.broadcast %cst_32 : f32 to vector<1x32xf32>
    %90 = arith.divf %88, %89 : vector<1x32xf32>
    %91 = vector.broadcast %90 : vector<1x32xf32> to vector<16x32xf32>
    %92 = arith.subf %86, %91 : vector<16x32xf32>
    %93 = arith.mulf %92, %92 : vector<16x32xf32>
    %cst_33 = arith.constant dense<0.000000e+00> : vector<32xf32>
    %94 = vector.multi_reduction <add>, %93, %cst_33 [0] : vector<16x32xf32> to vector<32xf32>
    %95 = vector.shape_cast %94 : vector<32xf32> to vector<1x32xf32>
    %cst_34 = arith.constant 1.600000e+01 : f32
    %96 = vector.broadcast %cst_34 : f32 to vector<1x32xf32>
    %97 = arith.divf %95, %96 : vector<1x32xf32>
    %98 = vector.broadcast %90 : vector<1x32xf32> to vector<16x32xf32>
    %99 = arith.subf %86, %98 : vector<16x32xf32>
    %cst_35 = arith.constant 9.99999974E-6 : f32
    %100 = vector.broadcast %cst_35 : f32 to vector<1x32xf32>
    %101 = arith.addf %97, %100 : vector<1x32xf32>
    %102 = math.rsqrt %101 : vector<1x32xf32>
    %103 = vector.broadcast %102 : vector<1x32xf32> to vector<16x32xf32>
    %104 = arith.mulf %99, %103 : vector<16x32xf32>
    %105 = vector.broadcast %5 : vector<1x32xf32> to vector<16x32xf32>
    %106 = arith.mulf %104, %105 : vector<16x32xf32>
    %107 = vector.broadcast %6 : vector<1x32xf32> to vector<16x32xf32>
    %108 = arith.addf %106, %107 : vector<16x32xf32>
    %cst_36 = arith.constant 0.000000e+00 : f32
    %109 = vector.broadcast %cst_36 : f32 to vector<16x32xf32>
    %110 = arith.maximumf %108, %109 : vector<16x32xf32>
    %c0_37 = arith.constant 0 : index
    %c0_38 = arith.constant 0 : index
    %111 = vector.load %arg4[%c0_37, %c0_38] : memref<32x128xbf16, #tpu.memory_space<vmem>>, vector<32x128xbf16>
    %112 = arith.truncf %110 : vector<16x32xf32> to vector<16x32xbf16>
    %cst_39 = arith.constant dense<0.000000e+00> : vector<16x128xf32>
    %113 = tpu.matmul %112, %111, %cst_39 {dimension_numbers = #tpu.dot_dimension_numbers<[1], [0], [0], [1], [0, 0, 1, 1], [], []>} : vector<16x32xbf16>, vector<32x128xbf16>, vector<16x128xf32> -> vector<16x128xf32>
    %114 = vector.broadcast %7 : vector<1x128xf32> to vector<16x128xf32>
    %115 = arith.addf %113, %114 : vector<16x128xf32>
    %c0_40 = arith.constant 0 : index
    %c0_41 = arith.constant 0 : index
    %116 = vector.load %arg6[%c0_40, %c0_41] : memref<16x128xf32, #tpu.memory_space<vmem>>, vector<16x128xf32>
    tpu.vector_store %arg6[%c0_40, %c0_41], %115 {strides = array<i32>} : memref<16x128xf32, #tpu.memory_space<vmem>>, vector<16x128xf32>,
    return
  }
}

</mosaic_0001>

<llo_original>
// kernel: full_connected_forward.1
$region0: #{full_connected_forward.1}
  #allocation0 [shape = 'u32[]', space=smem, size = 0x4, offset = 0x4, fixed_abs, tag = 'smem constant byte address 0x4 - core index']
  #allocation1 [shape = 'u32[144,128]{1,0:T(1,128)}', space=vmem, size = 0x12000, scoped, tag = 'internal scratch']
  %s0 = inlined_call_operand.vmem [shape: s32[64,1], index: 0, kind: input, shape index: {}]
  %s1 = inlined_call_operand.vmem [shape: s32[16,1], index: 1, kind: input, shape index: {}]
  %s2 = inlined_call_operand.vmem [shape: bf16[100,32], index: 2, kind: input, shape index: {}]
  %s3 = inlined_call_operand.vmem [shape: bf16[3,32,32], index: 3, kind: input, shape index: {}]
  %s4 = inlined_call_operand.vmem [shape: bf16[32,128], index: 4, kind: input, shape index: {}]
  %s5 = inlined_call_operand.vmem [shape: f32[8,128], index: 5, kind: input, shape index: {}]
  %s6 = inlined_call_operand.vmem [shape: f32[16,128], index: 6, kind: output, shape index: {}]
  %s7 = sld [smem:[#allocation0]]
  $region34: #{full_connected_forward.1} parent=0
    _
  %s9 = ssub.s32 1, %s7
  %s10 = scalar_select 0, %s9, %s7
  // Predicated region
  $region2: #{full_connected_forward.1} parent=0 // pred_check
    _
  $region3: #{full_connected_forward.1} parent=0 // pred_check_branch
    %12 = sbr.rel (0) target = $region5
  $region4: #{full_connected_forward.1} parent=0 // pred_region
    _
  $region5: #{full_connected_forward.1} parent=0 // pred_fallthru
    _
  // Predicated region
  $region6: #{full_connected_forward.1} parent=0 // pred_check
    _
  $region7: #{full_connected_forward.1} parent=0 // pred_check_branch
    %14 = sbr.rel (0) target = $region9
  $region8: #{full_connected_forward.1} parent=0 // pred_region
    _
  $region9: #{full_connected_forward.1} parent=0 // pred_fallthru
    _
  // Predicated region
  $region10: #{full_connected_forward.1} parent=0 // pred_check
    _
  $region11: #{full_connected_forward.1} parent=0 // pred_check_branch
    %16 = sbr.rel (0) target = $region13
  $region12: #{full_connected_forward.1} parent=0 // pred_region
    _
  $region13: #{full_connected_forward.1} parent=0 // pred_fallthru
    _
  // Predicated region
  $region14: #{full_connected_forward.1} parent=0 // pred_check
    _
  $region15: #{full_connected_forward.1} parent=0 // pred_check_branch
    %18 = sbr.rel (0) target = $region17
  $region16: #{full_connected_forward.1} parent=0 // pred_region
    _
  $region17: #{full_connected_forward.1} parent=0 // pred_fallthru
    _
  // Predicated region
  $region18: #{full_connected_forward.1} parent=0 // pred_check
    _
  $region19: #{full_connected_forward.1} parent=0 // pred_check_branch
    %20 = sbr.rel (0) target = $region21
  $region20: #{full_connected_forward.1} parent=0 // pred_region
    _
  $region21: #{full_connected_forward.1} parent=0 // pred_fallthru
    _
  // Predicated region
  $region22: #{full_connected_forward.1} parent=0 // pred_check
    _
  $region23: #{full_connected_forward.1} parent=0 // pred_check_branch
    %22 = sbr.rel (0) target = $region25
  $region24: #{full_connected_forward.1} parent=0 // pred_region
    _
  $region25: #{full_connected_forward.1} parent=0 // pred_fallthru
    _
  %v24 = vld [vmem:[%s5] sm:$0xff]
  %v25 = vld [vmem:[%s2] sm:$0xf]
  %v26 = vld [vmem:[%s2 + $0x4] sm:$0xf]
  %v27 = vld [vmem:[%s2 + $0x8] sm:$0xf]
  %v28 = vld [vmem:[%s2 + $0xc] sm:$0xf]
  %v29 = vld [vmem:[%s2 + $0x10] sm:$0xf]
  %v30 = vld [vmem:[%s2 + $0x14] sm:$0xf]
  %v31 = vld [vmem:[%s2 + $0x18] sm:$0xf]
  %v32 = vld [vmem:[%s2 + $0x1c] sm:$0xf]
  %v33 = vld [vmem:[%s2 + $0x20] sm:$0xf]
  %v34 = vld [vmem:[%s2 + $0x24] sm:$0xf]
  %v35 = vld [vmem:[%s2 + $0x28] sm:$0xf]
  %v36 = vld [vmem:[%s2 + $0x2c] sm:$0xf]
  %v37 = vld [vmem:[%s2 + $0x30] sm:$0x3]
  %v38 = vld [vmem:[%s3] sm:$0xf]
  %v39 = vld [vmem:[%s3 + $0x4] sm:$0xf]
  %v40 = vld [vmem:[%s3 + $0x8] sm:$0xf]
  %v41 = vld [vmem:[%s3 + $0xc] sm:$0xf]
  %s42 = scalar_lea.vmem %s3, 16
  %v43 = vld [vmem:[%s42] sm:$0xf]
  %v44 = vld [vmem:[%s42 + $0x4] sm:$0xf]
  %v45 = vld [vmem:[%s42 + $0x8] sm:$0xf]
  %v46 = vld [vmem:[%s42 + $0xc] sm:$0xf]
  %s47 = scalar_lea.vmem %s3, 32
  %v48 = vld [vmem:[%s47] sm:$0xf]
  %v49 = vld [vmem:[%s47 + $0x4] sm:$0xf]
  %v50 = vld [vmem:[%s47 + $0x8] sm:$0xf]
  %v51 = vld [vmem:[%s47 + $0xc] sm:$0xf]
  %v52 = vld [vmem:[%s0] sm:$0xff]
  %v53 = vld [vmem:[%s0 + $0x8] sm:$0xff]
  %v54 = vld [vmem:[%s0 + $0x10] sm:$0xff]
  %v55 = vld [vmem:[%s0 + $0x18] sm:$0xff]
  %v56 = vld [vmem:[%s0 + $0x20] sm:$0xff]
  %v57 = vld [vmem:[%s0 + $0x28] sm:$0xff]
  %v58 = vld [vmem:[%s0 + $0x30] sm:$0xff]
  %v59 = vld [vmem:[%s0 + $0x38] sm:$0xff]
  %v60 = vlaneseq
  %v61 = vand.u32 %v60, 127
  %62 = vset.pattern.permute.xlu0 0
  %63 = vperm.xlu0 %62, %v52
  %v64 = vpop.permute.xlu0 %63
  %65 = vset.pattern.permute.xlu0 0
  %66 = vperm.xlu0 %65, %v53
  %v67 = vpop.permute.xlu0 %66
  %68 = vset.pattern.permute.xlu0 0
  %69 = vperm.xlu0 %68, %v54
  %v70 = vpop.permute.xlu0 %69
  %71 = vset.pattern.permute.xlu0 0
  %72 = vperm.xlu0 %71, %v55
  %v73 = vpop.permute.xlu0 %72
  %74 = vset.pattern.permute.xlu0 0
  %75 = vperm.xlu0 %74, %v56
  %v76 = vpop.permute.xlu0 %75
  %77 = vset.pattern.permute.xlu0 0
  %78 = vperm.xlu0 %77, %v57
  %v79 = vpop.permute.xlu0 %78
  %80 = vset.pattern.permute.xlu0 0
  %81 = vperm.xlu0 %80, %v58
  %v82 = vpop.permute.xlu0 %81
  %83 = vset.pattern.permute.xlu0 0
  %84 = vperm.xlu0 %83, %v59
  %v85 = vpop.permute.xlu0 %84
  %vm86 = vcmp.eq.s32.totalorder %v64, %v61
  %vm87 = vcmp.eq.s32.totalorder %v67, %v61
  %vm88 = vcmp.eq.s32.totalorder %v70, %v61
  %vm89 = vcmp.eq.s32.totalorder %v73, %v61
  %vm90 = vcmp.eq.s32.totalorder %v76, %v61
  %vm91 = vcmp.eq.s32.totalorder %v79, %v61
  %vm92 = vcmp.eq.s32.totalorder %v82, %v61
  %vm93 = vcmp.eq.s32.totalorder %v85, %v61
  %v94 = vsel %vm86, 1, 0
  %v95 = vsel %vm87, 1, 0
  %v96 = vsel %vm88, 1, 0
  %v97 = vsel %vm89, 1, 0
  %v98 = vsel %vm90, 1, 0
  %v99 = vsel %vm91, 1, 0
  %v100 = vsel %vm92, 1, 0
  %v101 = vsel %vm93, 1, 0
  %v102 = vcvt.s32.f32 %v94
  %v103 = vcvt.s32.f32 %v95
  %v104 = vcvt.s32.f32 %v96
  %v105 = vcvt.s32.f32 %v97
  %v106 = vcvt.s32.f32 %v98
  %v107 = vcvt.s32.f32 %v99
  %v108 = vcvt.s32.f32 %v100
  %v109 = vcvt.s32.f32 %v101
  %v110 = vpack.c.bf16 %v103, %v102
  %v111 = vpack.c.bf16 %v105, %v104
  %v112 = vpack.c.bf16 %v107, %v106
  %v113 = vpack.c.bf16 %v109, %v108
  %v127 = vunpack.c.l.b16 %v25
  %v128 = vunpack.c.l.b16 %v26
  %v129 = vunpack.c.l.b16 %v27
  %v130 = vunpack.c.l.b16 %v28
  %v131 = vunpack.c.l.b16 %v29
  %v132 = vunpack.c.l.b16 %v30
  %v133 = vunpack.c.l.b16 %v31
  %v134 = vunpack.c.l.b16 %v32
  %v135 = vunpack.c.l.b16 %v33
  %v136 = vunpack.c.l.b16 %v34
  %v137 = vunpack.c.l.b16 %v35
  %v138 = vunpack.c.l.b16 %v36
  %v139 = vunpack.c.l.b16 %v37
  %v140 = vpack.c.b16 %v128, %v127
  %v141 = vpack.c.b16 %v130, %v129
  %v142 = vpack.c.b16 %v132, %v131
  %v143 = vpack.c.b16 %v134, %v133
  %v144 = vpack.c.b16 %v136, %v135
  %v145 = vpack.c.b16 %v138, %v137
  %v146 = vpack.c.b16 %v139, %v139
  %vm153 = vcmask 818176
  %v155 = vsel %vm153, %v110, 0
  %v158 = vsel %vm153, %v111, 0
  %v161 = vsel %vm153, %v112, 0
  %v164 = vsel %vm153, %v113, 0
  %vm166 = vcmask 1041408
  %v168 = vsel %vm166, %v146, 0
  %170 = vmatprep.subr.bf16.mxu0 0
  %171 = vmatpush1.bf16.msra.mxu0 %v140
  %172 = vmatprep.subr.bf16.mxu0 0
  %173 = vmatpush1.bf16.msra.mxu0 %v141
  %174 = vmatprep.subr.bf16.mxu0 0
  %175 = vmatpush1.bf16.msra.mxu0 %v142
  %176 = vmatprep.subr.bf16.mxu0 0
  %177 = vmatpush1.bf16.msra.mxu0 %v143
  %178 = vmatprep.subr.bf16.mxu0 0
  %179 = vmatpush1.bf16.msra.mxu0 %v144
  %180 = vmatprep.subr.bf16.mxu0 0
  %181 = vmatpush1.bf16.msra.mxu0 %v145
  %182 = vmatprep.subr.bf16.mxu0 0
  %183 = vmatpush1.bf16.msra.mxu0 %v168
  %184 = vmatprep.subr.bf16.mxu0 0
  %185 = vmatpush1.bf16.msra.mxu0 0
  %186 = vmatprep.subr.bf16.mxu0 0
  %187 = vmatpush1.bf16.msra.mxu0 0
  %188 = vmatprep.subr.bf16.mxu0 0
  %189 = vmatpush1.bf16.msra.mxu0 0
  %190 = vmatprep.subr.bf16.mxu0 0
  %191 = vmatpush1.bf16.msra.mxu0 0
  %192 = vmatprep.subr.bf16.mxu0 0
  %193 = vmatpush1.bf16.msra.mxu0 0
  %194 = vmatprep.subr.bf16.mxu0 0
  %195 = vmatpush1.bf16.msra.mxu0 0
  %196 = vmatprep.subr.bf16.mxu0 0
  %197 = vmatpush1.bf16.msra.mxu0 0
  %198 = vmatprep.subr.bf16.mxu0 0
  %199 = vmatpush1.bf16.msra.mxu0 0
  %200 = vmatprep.subr.bf16.mxu0 0
  %201 = vmatpush1.bf16.msra.mxu0 0
  %202 = vmatprep.mubr.bf16.mxu0 0
  %203 = vmatmul.mubr.bf16.gmra.mrb[0].mxu0 %v155
  %v204 = vpop.f32.mrb[0].mxu0
  %v205 = vadd.f32 0.0, %v204
  %v206 = vpop.f32.mrb[0].mxu0
  %v207 = vpop.f32.mrb[0].mxu0
  %v208 = vadd.f32 0.0, %v207
  %v209 = vpop.f32.mrb[0].mxu0
  %210 = vmatprep.mubr.bf16.mxu0 0
  %211 = vmatmul.mubr.bf16.gmra.mrb[0].mxu0 %v158
  %v212 = vpop.f32.mrb[0].mxu0
  %v213 = vadd.f32 0.0, %v212
  %v214 = vpop.f32.mrb[0].mxu0
  %v215 = vpop.f32.mrb[0].mxu0
  %v216 = vadd.f32 0.0, %v215
  %v217 = vpop.f32.mrb[0].mxu0
  %218 = vmatprep.mubr.bf16.mxu0 0
  %219 = vmatmul.mubr.bf16.gmra.mrb[0].mxu0 %v161
  %v220 = vpop.f32.mrb[0].mxu0
  %v221 = vadd.f32 0.0, %v220
  %v222 = vpop.f32.mrb[0].mxu0
  %v223 = vpop.f32.mrb[0].mxu0
  %v224 = vadd.f32 0.0, %v223
  %v225 = vpop.f32.mrb[0].mxu0
  %226 = vmatprep.mubr.bf16.mxu0 0
  %227 = vmatmul.mubr.bf16.gmra.mrb[0].mxu0 %v164
  %v228 = vpop.f32.mrb[0].mxu0
  %v229 = vadd.f32 0.0, %v228
  %v230 = vpop.f32.mrb[0].mxu0
  %v231 = vpop.f32.mrb[0].mxu0
  %v232 = vadd.f32 0.0, %v231
  %v233 = vpop.f32.mrb[0].mxu0
  %234 = vdwg.mxu0
  %v235 = vpack.c.bf16 %v208, %v205
  %v236 = vpack.c.bf16 %v216, %v213
  %v237 = vpack.c.bf16 %v224, %v221
  %v238 = vpack.c.bf16 %v232, %v229
  %v243 = vunpack.c.l.b16 %v38
  %v244 = vunpack.c.l.b16 %v39
  %v245 = vunpack.c.l.b16 %v40
  %v246 = vunpack.c.l.b16 %v41
  %v247 = vpack.c.b16 %v244, %v243
  %v248 = vpack.c.b16 %v246, %v245
  %vm251 = vcmask 261120
  %v253 = vsel %vm251, %v235, 0
  %v256 = vsel %vm251, %v236, 0
  %v259 = vsel %vm251, %v237, 0
  %v262 = vsel %vm251, %v238, 0
  %264 = vmatprep.subr.bf16.mxu0 0
  %265 = vmatpush1.bf16.msra.mxu0 %v247
  %266 = vmatprep.subr.bf16.mxu0 0
  %267 = vmatpush1.bf16.msra.mxu0 %v248
  %268 = vmatprep.subr.bf16.mxu0 0
  %269 = vmatpush1.bf16.msra.mxu0 0
  %270 = vmatprep.subr.bf16.mxu0 0
  %271 = vmatpush1.bf16.msra.mxu0 0
  %272 = vmatprep.subr.bf16.mxu0 0
  %273 = vmatpush1.bf16.msra.mxu0 0
  %274 = vmatprep.subr.bf16.mxu0 0
  %275 = vmatpush1.bf16.msra.mxu0 0
  %276 = vmatprep.subr.bf16.mxu0 0
  %277 = vmatpush1.bf16.msra.mxu0 0
  %278 = vmatprep.subr.bf16.mxu0 0
  %279 = vmatpush1.bf16.msra.mxu0 0
  %280 = vmatprep.subr.bf16.mxu0 0
  %281 = vmatpush1.bf16.msra.mxu0 0
  %282 = vmatprep.subr.bf16.mxu0 0
  %283 = vmatpush1.bf16.msra.mxu0 0
  %284 = vmatprep.subr.bf16.mxu0 0
  %285 = vmatpush1.bf16.msra.mxu0 0
  %286 = vmatprep.subr.bf16.mxu0 0
  %287 = vmatpush1.bf16.msra.mxu0 0
  %288 = vmatprep.subr.bf16.mxu0 0
  %289 = vmatpush1.bf16.msra.mxu0 0
  %290 = vmatprep.subr.bf16.mxu0 0
  %291 = vmatpush1.bf16.msra.mxu0 0
  %292 = vmatprep.subr.bf16.mxu0 0
  %293 = vmatpush1.bf16.msra.mxu0 0
  %294 = vmatprep.subr.bf16.mxu0 0
  %295 = vmatpush1.bf16.msra.mxu0 0
  %296 = vmatprep.mubr.bf16.mxu0 0
  %297 = vmatmul.mubr.bf16.gmra.mrb[0].mxu0 %v253
  %v298 = vpop.f32.mrb[0].mxu0
  %v299 = vadd.f32 0.0, %v298
  %v300 = vpop.f32.mrb[0].mxu0
  %v301 = vpop.f32.mrb[0].mxu0
  %v302 = vadd.f32 0.0, %v301
  %v303 = vpop.f32.mrb[0].mxu0
  %304 = vmatprep.mubr.bf16.mxu0 0
  %305 = vmatmul.mubr.bf16.gmra.mrb[0].mxu0 %v256
  %v306 = vpop.f32.mrb[0].mxu0
  %v307 = vadd.f32 0.0, %v306
  %v308 = vpop.f32.mrb[0].mxu0
  %v309 = vpop.f32.mrb[0].mxu0
  %v310 = vadd.f32 0.0, %v309
  %v311 = vpop.f32.mrb[0].mxu0
  %312 = vmatprep.mubr.bf16.mxu0 0
  %313 = vmatmul.mubr.bf16.gmra.mrb[0].mxu0 %v259
  %v314 = vpop.f32.mrb[0].mxu0
  %v315 = vadd.f32 0.0, %v314
  %v316 = vpop.f32.mrb[0].mxu0
  %v317 = vpop.f32.mrb[0].mxu0
  %v318 = vadd.f32 0.0, %v317
  %v319 = vpop.f32.mrb[0].mxu0
  %320 = vmatprep.mubr.bf16.mxu0 0
  %321 = vmatmul.mubr.bf16.gmra.mrb[0].mxu0 %v262
  %v322 = vpop.f32.mrb[0].mxu0
  %v323 = vadd.f32 0.0, %v322
  %v324 = vpop.f32.mrb[0].mxu0
  %v325 = vpop.f32.mrb[0].mxu0
  %v326 = vadd.f32 0.0, %v325
  %v327 = vpop.f32.mrb[0].mxu0
  %328 = vdwg.mxu0
  %v329 = vsel %vm251, %v299, 0.0
  %v330 = vsel %vm251, %v302, 0.0
  %v331 = vadd.f32 %v329, %v330
  %v332 = vsel %vm251, %v307, 0.0
  %v333 = vadd.f32 %v331, %v332
  %v334 = vsel %vm251, %v310, 0.0
  %v335 = vadd.f32 %v333, %v334
  %v336 = vsel %vm251, %v315, 0.0
  %v337 = vadd.f32 %v335, %v336
  %v338 = vsel %vm251, %v318, 0.0
  %v339 = vadd.f32 %v337, %v338
  %v340 = vsel %vm251, %v323, 0.0
  %v341 = vadd.f32 %v339, %v340
  %v342 = vsel %vm251, %v326, 0.0
  %v343 = vadd.f32 %v341, %v342
  %v344 = vrot.slane %v343, 4
  %v345 = vadd.f32 %v343, %v344
  %v346 = vrot.slane %v345, 2
  %v347 = vadd.f32 %v345, %v346
  %v348 = vrot.slane %v347, 1
  %v349 = vadd.f32 %v347, %v348
  %v350 = vrcp.pop 64.0
  %v351 = vmul.f32 %v349, %v350
  %v352 = vsub.f32 %v299, %v351
  %v353 = vsub.f32 %v302, %v351
  %v354 = vsub.f32 %v307, %v351
  %v355 = vsub.f32 %v310, %v351
  %v356 = vsub.f32 %v315, %v351
  %v357 = vsub.f32 %v318, %v351
  %v358 = vsub.f32 %v323, %v351
  %v359 = vsub.f32 %v326, %v351
  %v360 = vmul.f32 %v352, %v352
  %v361 = vmul.f32 %v353, %v353
  %v362 = vmul.f32 %v354, %v354
  %v363 = vmul.f32 %v355, %v355
  %v364 = vmul.f32 %v356, %v356
  %v365 = vmul.f32 %v357, %v357
  %v366 = vmul.f32 %v358, %v358
  %v367 = vmul.f32 %v359, %v359
  %v368 = vsel %vm251, %v360, 0.0
  %v369 = vsel %vm251, %v361, 0.0
  %v370 = vadd.f32 %v368, %v369
  %v371 = vsel %vm251, %v362, 0.0
  %v372 = vadd.f32 %v370, %v371
  %v373 = vsel %vm251, %v363, 0.0
  %v374 = vadd.f32 %v372, %v373
  %v375 = vsel %vm251, %v364, 0.0
  %v376 = vadd.f32 %v374, %v375
  %v377 = vsel %vm251, %v365, 0.0
  %v378 = vadd.f32 %v376, %v377
  %v379 = vsel %vm251, %v366, 0.0
  %v380 = vadd.f32 %v378, %v379
  %v381 = vsel %vm251, %v367, 0.0
  %v382 = vadd.f32 %v380, %v381
  %v383 = vrot.slane %v382, 4
  %v384 = vadd.f32 %v382, %v383
  %v385 = vrot.slane %v384, 2
  %v386 = vadd.f32 %v384, %v385
  %v387 = vrot.slane %v386, 1
  %v388 = vadd.f32 %v386, %v387
  %v389 = vmul.f32 %v388, %v350
  %v390 = vld [vmem:[%s1] sm:$0xff]
  %v391 = vld [vmem:[%s1 + $0x8] sm:$0xff]
  %392 = vset.pattern.permute.xlu0 0
  %393 = vperm.xlu0 %392, %v390
  %v394 = vpop.permute.xlu0 %393
  %395 = vset.pattern.permute.xlu0 0
  %396 = vperm.xlu0 %395, %v391
  %v397 = vpop.permute.xlu0 %396
  %vm398 = vcmp.eq.s32.totalorder %v394, %v61
  %vm399 = vcmp.eq.s32.totalorder %v397, %v61
  %v400 = vsel %vm398, 1, 0
  %v401 = vsel %vm399, 1, 0
  %v402 = vcvt.s32.f32 %v400
  %v403 = vcvt.s32.f32 %v401
  %v404 = vpack.c.bf16 %v403, %v402
  %v406 = vsel %vm153, %v404, 0
  %408 = vmatprep.subr.bf16.mxu0 0
  %409 = vmatpush1.bf16.msra.mxu0 %v140
  %410 = vmatprep.subr.bf16.mxu0 0
  %411 = vmatpush1.bf16.msra.mxu0 %v141
  %412 = vmatprep.subr.bf16.mxu0 0
  %413 = vmatpush1.bf16.msra.mxu0 %v142
  %414 = vmatprep.subr.bf16.mxu0 0
  %415 = vmatpush1.bf16.msra.mxu0 %v143
  %416 = vmatprep.subr.bf16.mxu0 0
  %417 = vmatpush1.bf16.msra.mxu0 %v144
  %418 = vmatprep.subr.bf16.mxu0 0
  %419 = vmatpush1.bf16.msra.mxu0 %v145
  %420 = vmatprep.subr.bf16.mxu0 0
  %421 = vmatpush1.bf16.msra.mxu0 %v168
  %422 = vmatprep.subr.bf16.mxu0 0
  %423 = vmatpush1.bf16.msra.mxu0 0
  %424 = vmatprep.subr.bf16.mxu0 0
  %425 = vmatpush1.bf16.msra.mxu0 0
  %426 = vmatprep.subr.bf16.mxu0 0
  %427 = vmatpush1.bf16.msra.mxu0 0
  %428 = vmatprep.subr.bf16.mxu0 0
  %429 = vmatpush1.bf16.msra.mxu0 0
  %430 = vmatprep.subr.bf16.mxu0 0
  %431 = vmatpush1.bf16.msra.mxu0 0
  %432 = vmatprep.subr.bf16.mxu0 0
  %433 = vmatpush1.bf16.msra.mxu0 0
  %434 = vmatprep.subr.bf16.mxu0 0
  %435 = vmatpush1.bf16.msra.mxu0 0
  %436 = vmatprep.subr.bf16.mxu0 0
  %437 = vmatpush1.bf16.msra.mxu0 0
  %438 = vmatprep.subr.bf16.mxu0 0
  %439 = vmatpush1.bf16.msra.mxu0 0
  %440 = vmatprep.mubr.bf16.mxu0 0
  %441 = vmatmul.mubr.bf16.gmra.mrb[0].mxu0 %v406
  %v442 = vpop.f32.mrb[0].mxu0
  %v443 = vadd.f32 0.0, %v442
  %v444 = vpop.f32.mrb[0].mxu0
  %v445 = vpop.f32.mrb[0].mxu0
  %v446 = vadd.f32 0.0, %v445
  %v447 = vpop.f32.mrb[0].mxu0
  %448 = vdwg.mxu0
  %v449 = vpack.c.bf16 %v446, %v443
  %v451 = vsel %vm251, %v449, 0
  %453 = vmatprep.subr.bf16.mxu0 0
  %454 = vmatpush1.bf16.msra.mxu0 %v247
  %455 = vmatprep.subr.bf16.mxu0 0
  %456 = vmatpush1.bf16.msra.mxu0 %v248
  %457 = vmatprep.subr.bf16.mxu0 0
  %458 = vmatpush1.bf16.msra.mxu0 0
  %459 = vmatprep.subr.bf16.mxu0 0
  %460 = vmatpush1.bf16.msra.mxu0 0
  %461 = vmatprep.subr.bf16.mxu0 0
  %462 = vmatpush1.bf16.msra.mxu0 0
  %463 = vmatprep.subr.bf16.mxu0 0
  %464 = vmatpush1.bf16.msra.mxu0 0
  %465 = vmatprep.subr.bf16.mxu0 0
  %466 = vmatpush1.bf16.msra.mxu0 0
  %467 = vmatprep.subr.bf16.mxu0 0
  %468 = vmatpush1.bf16.msra.mxu0 0
  %469 = vmatprep.subr.bf16.mxu0 0
  %470 = vmatpush1.bf16.msra.mxu0 0
  %471 = vmatprep.subr.bf16.mxu0 0
  %472 = vmatpush1.bf16.msra.mxu0 0
  %473 = vmatprep.subr.bf16.mxu0 0
  %474 = vmatpush1.bf16.msra.mxu0 0
  %475 = vmatprep.subr.bf16.mxu0 0
  %476 = vmatpush1.bf16.msra.mxu0 0
  %477 = vmatprep.subr.bf16.mxu0 0
  %478 = vmatpush1.bf16.msra.mxu0 0
  %479 = vmatprep.subr.bf16.mxu0 0
  %480 = vmatpush1.bf16.msra.mxu0 0
  %481 = vmatprep.subr.bf16.mxu0 0
  %482 = vmatpush1.bf16.msra.mxu0 0
  %483 = vmatprep.subr.bf16.mxu0 0
  %484 = vmatpush1.bf16.msra.mxu0 0
  %485 = vmatprep.mubr.bf16.mxu0 0
  %486 = vmatmul.mubr.bf16.gmra.mrb[0].mxu0 %v451
  %v487 = vpop.f32.mrb[0].mxu0
  %v488 = vadd.f32 0.0, %v487
  %v489 = vpop.f32.mrb[0].mxu0
  %v490 = vpop.f32.mrb[0].mxu0
  %v491 = vadd.f32 0.0, %v490
  %v492 = vpop.f32.mrb[0].mxu0
  %493 = vdwg.mxu0
  %v494 = vsub.f32 %v488, %v351
  %v495 = vsub.f32 %v491, %v351
  %v496 = vadd.f32 %v389, 1e-05
  %v497 = vrsqrt.pop %v496
  %v498 = vmul.f32 %v494, %v497
  %v499 = vmul.f32 %v495, %v497
  %v500 = vlaneseq
  %v501 = vshrl.u32 %v500, 7
  %v502 = vsub.s32 0, %v501
  %v503 = vrot.slane %v24, %v502
  %v504 = vmul.f32 %v498, %v503
  %v505 = vmul.f32 %v499, %v503
  %v506 = vlaneseq
  %v507 = vshrl.u32 %v506, 7
  %v508 = vsub.s32 1, %v507
  %v509 = vrot.slane %v24, %v508
  %v510 = vadd.f32 %v504, %v509
  %v511 = vadd.f32 %v505, %v509
  %v512 = vmax.f32 %v510, 0.0
  %v513 = vmax.f32 %v511, 0.0
  %v514 = vpack.c.bf16 %v513, %v512
  %v519 = vunpack.c.l.b16 %v43
  %v520 = vunpack.c.l.b16 %v44
  %v521 = vunpack.c.l.b16 %v45
  %v522 = vunpack.c.l.b16 %v46
  %v523 = vpack.c.b16 %v520, %v519
  %v524 = vpack.c.b16 %v522, %v521
  %v528 = vsel %vm251, %v514, 0
  %530 = vmatprep.subr.bf16.mxu0 0
  %531 = vmatpush1.bf16.msra.mxu0 %v523
  %532 = vmatprep.subr.bf16.mxu0 0
  %533 = vmatpush1.bf16.msra.mxu0 %v524
  %534 = vmatprep.subr.bf16.mxu0 0
  %535 = vmatpush1.bf16.msra.mxu0 0
  %536 = vmatprep.subr.bf16.mxu0 0
  %537 = vmatpush1.bf16.msra.mxu0 0
  %538 = vmatprep.subr.bf16.mxu0 0
  %539 = vmatpush1.bf16.msra.mxu0 0
  %540 = vmatprep.subr.bf16.mxu0 0
  %541 = vmatpush1.bf16.msra.mxu0 0
  %542 = vmatprep.subr.bf16.mxu0 0
  %543 = vmatpush1.bf16.msra.mxu0 0
  %544 = vmatprep.subr.bf16.mxu0 0
  %545 = vmatpush1.bf16.msra.mxu0 0
  %546 = vmatprep.subr.bf16.mxu0 0
  %547 = vmatpush1.bf16.msra.mxu0 0
  %548 = vmatprep.subr.bf16.mxu0 0
  %549 = vmatpush1.bf16.msra.mxu0 0
  %550 = vmatprep.subr.bf16.mxu0 0
  %551 = vmatpush1.bf16.msra.mxu0 0
  %552 = vmatprep.subr.bf16.mxu0 0
  %553 = vmatpush1.bf16.msra.mxu0 0
  %554 = vmatprep.subr.bf16.mxu0 0
  %555 = vmatpush1.bf16.msra.mxu0 0
  %556 = vmatprep.subr.bf16.mxu0 0
  %557 = vmatpush1.bf16.msra.mxu0 0
  %558 = vmatprep.subr.bf16.mxu0 0
  %559 = vmatpush1.bf16.msra.mxu0 0
  %560 = vmatprep.subr.bf16.mxu0 0
  %561 = vmatpush1.bf16.msra.mxu0 0
  %562 = vmatprep.mubr.bf16.mxu0 0
  %563 = vmatmul.mubr.bf16.gmra.mrb[0].mxu0 %v528
  %v564 = vpop.f32.mrb[0].mxu0
  %v565 = vadd.f32 0.0, %v564
  %v566 = vpop.f32.mrb[0].mxu0
  %v567 = vpop.f32.mrb[0].mxu0
  %v568 = vadd.f32 0.0, %v567
  %v569 = vpop.f32.mrb[0].mxu0
  %570 = vdwg.mxu0
  %v571 = vsel %vm251, %v565, 0.0
  %v572 = vsel %vm251, %v568, 0.0
  %v573 = vadd.f32 %v571, %v572
  %v574 = vrot.slane %v573, 4
  %v575 = vadd.f32 %v573, %v574
  %v576 = vrot.slane %v575, 2
  %v577 = vadd.f32 %v575, %v576
  %v578 = vrot.slane %v577, 1
  %v579 = vadd.f32 %v577, %v578
  %v580 = vrcp.pop 16.0
  %v581 = vmul.f32 %v579, %v580
  %v582 = vsub.f32 %v565, %v581
  %v583 = vsub.f32 %v568, %v581
  %v584 = vmul.f32 %v582, %v582
  %v585 = vmul.f32 %v583, %v583
  %v586 = vsel %vm251, %v584, 0.0
  %v587 = vsel %vm251, %v585, 0.0
  %v588 = vadd.f32 %v586, %v587
  %v589 = vrot.slane %v588, 4
  %v590 = vadd.f32 %v588, %v589
  %v591 = vrot.slane %v590, 2
  %v592 = vadd.f32 %v590, %v591
  %v593 = vrot.slane %v592, 1
  %v594 = vadd.f32 %v592, %v593
  %v595 = vmul.f32 %v594, %v580
  %v596 = vadd.f32 %v595, 1e-05
  %v597 = vrsqrt.pop %v596
  %v598 = vmul.f32 %v582, %v597
  %v599 = vmul.f32 %v583, %v597
  %v600 = vlaneseq
  %v601 = vshrl.u32 %v600, 7
  %v602 = vsub.s32 2, %v601
  %v603 = vrot.slane %v24, %v602
  %v604 = vmul.f32 %v598, %v603
  %v605 = vmul.f32 %v599, %v603
  %v606 = vlaneseq
  %v607 = vshrl.u32 %v606, 7
  %v608 = vsub.s32 3, %v607
  %v609 = vrot.slane %v24, %v608
  %v610 = vadd.f32 %v604, %v609
  %v611 = vadd.f32 %v605, %v609
  %v612 = vmax.f32 %v610, 0.0
  %v613 = vmax.f32 %v611, 0.0
  %v614 = vpack.c.bf16 %v613, %v612
  %v619 = vunpack.c.l.b16 %v48
  %v620 = vunpack.c.l.b16 %v49
  %v621 = vunpack.c.l.b16 %v50
  %v622 = vunpack.c.l.b16 %v51
  %v623 = vpack.c.b16 %v620, %v619
  %v624 = vpack.c.b16 %v622, %v621
  %v628 = vsel %vm251, %v614, 0
  %630 = vmatprep.subr.bf16.mxu0 0
  %631 = vmatpush1.bf16.msra.mxu0 %v623
  %632 = vmatprep.subr.bf16.mxu0 0
  %633 = vmatpush1.bf16.msra.mxu0 %v624
  %634 = vmatprep.subr.bf16.mxu0 0
  %635 = vmatpush1.bf16.msra.mxu0 0
  %636 = vmatprep.subr.bf16.mxu0 0
  %637 = vmatpush1.bf16.msra.mxu0 0
  %638 = vmatprep.subr.bf16.mxu0 0
  %639 = vmatpush1.bf16.msra.mxu0 0
  %640 = vmatprep.subr.bf16.mxu0 0
  %641 = vmatpush1.bf16.msra.mxu0 0
  %642 = vmatprep.subr.bf16.mxu0 0
  %643 = vmatpush1.bf16.msra.mxu0 0
  %644 = vmatprep.subr.bf16.mxu0 0
  %645 = vmatpush1.bf16.msra.mxu0 0
  %646 = vmatprep.subr.bf16.mxu0 0
  %647 = vmatpush1.bf16.msra.mxu0 0
  %648 = vmatprep.subr.bf16.mxu0 0
  %649 = vmatpush1.bf16.msra.mxu0 0
  %650 = vmatprep.subr.bf16.mxu0 0
  %651 = vmatpush1.bf16.msra.mxu0 0
  %652 = vmatprep.subr.bf16.mxu0 0
  %653 = vmatpush1.bf16.msra.mxu0 0
  %654 = vmatprep.subr.bf16.mxu0 0
  %655 = vmatpush1.bf16.msra.mxu0 0
  %656 = vmatprep.subr.bf16.mxu0 0
  %657 = vmatpush1.bf16.msra.mxu0 0
  %658 = vmatprep.subr.bf16.mxu0 0
  %659 = vmatpush1.bf16.msra.mxu0 0
  %660 = vmatprep.subr.bf16.mxu0 0
  %661 = vmatpush1.bf16.msra.mxu0 0
  %662 = vmatprep.mubr.bf16.mxu0 0
  %663 = vmatmul.mubr.bf16.gmra.mrb[0].mxu0 %v628
  %v664 = vpop.f32.mrb[0].mxu0
  %v665 = vadd.f32 0.0, %v664
  %v666 = vpop.f32.mrb[0].mxu0
  %v667 = vpop.f32.mrb[0].mxu0
  %v668 = vadd.f32 0.0, %v667
  %v669 = vpop.f32.mrb[0].mxu0
  %670 = vdwg.mxu0
  %v671 = vsel %vm251, %v665, 0.0
  %v672 = vsel %vm251, %v668, 0.0
  %v673 = vadd.f32 %v671, %v672
  %v674 = vrot.slane %v673, 4
  %v675 = vadd.f32 %v673, %v674
  %v676 = vrot.slane %v675, 2
  %v677 = vadd.f32 %v675, %v676
  %v678 = vrot.slane %v677, 1
  %v679 = vadd.f32 %v677, %v678
  %v680 = vmul.f32 %v679, %v580
  %v681 = vsub.f32 %v665, %v680
  %v682 = vsub.f32 %v668, %v680
  %v683 = vmul.f32 %v681, %v681
  %v684 = vmul.f32 %v682, %v682
  %v685 = vsel %vm251, %v683, 0.0
  %v686 = vsel %vm251, %v684, 0.0
  %v687 = vadd.f32 %v685, %v686
  %v688 = vrot.slane %v687, 4
  %v689 = vadd.f32 %v687, %v688
  %v690 = vrot.slane %v689, 2
  %v691 = vadd.f32 %v689, %v690
  %v692 = vrot.slane %v691, 1
  %v693 = vadd.f32 %v691, %v692
  %v694 = vmul.f32 %v693, %v580
  %v695 = vadd.f32 %v694, 1e-05
  %v696 = vrsqrt.pop %v695
  %v697 = vmul.f32 %v681, %v696
  %v698 = vmul.f32 %v682, %v696
  %v699 = vlaneseq
  %v700 = vshrl.u32 %v699, 7
  %v701 = vsub.s32 4, %v700
  %v702 = vrot.slane %v24, %v701
  %v703 = vmul.f32 %v697, %v702
  %v704 = vmul.f32 %v698, %v702
  %v705 = vlaneseq
  %v706 = vshrl.u32 %v705, 7
  %v707 = vsub.s32 5, %v706
  %v708 = vrot.slane %v24, %v707
  %v709 = vadd.f32 %v703, %v708
  %v710 = vadd.f32 %v704, %v708
  %v711 = vmax.f32 %v709, 0.0
  %v712 = vmax.f32 %v710, 0.0
  %v713 = vld [vmem:[%s4] sm:$0xf]
  %v714 = vld [vmem:[%s4 + $0x4] sm:$0xf]
  %v715 = vld [vmem:[%s4 + $0x8] sm:$0xf]
  %v716 = vld [vmem:[%s4 + $0xc] sm:$0xf]
  %v717 = vpack.c.bf16 %v712, %v711
  %v718 = vlaneseq
  %v719 = vshrl.u32 %v718, 7
  %v720 = vsub.s32 6, %v719
  %v721 = vrot.slane %v24, %v720
  %v726 = vunpack.c.l.b16 %v713
  %v727 = vunpack.c.l.b16 %v714
  %v728 = vunpack.c.l.b16 %v715
  %v729 = vunpack.c.l.b16 %v716
  %v730 = vpack.c.b16 %v727, %v726
  %v731 = vpack.c.b16 %v729, %v728
  %v735 = vsel %vm251, %v717, 0
  %737 = vmatprep.subr.bf16.mxu0 0
  %738 = vmatpush1.bf16.msra.mxu0 %v730
  %739 = vmatprep.subr.bf16.mxu0 0
  %740 = vmatpush1.bf16.msra.mxu0 %v731
  %741 = vmatprep.subr.bf16.mxu0 0
  %742 = vmatpush1.bf16.msra.mxu0 0
  %743 = vmatprep.subr.bf16.mxu0 0
  %744 = vmatpush1.bf16.msra.mxu0 0
  %745 = vmatprep.subr.bf16.mxu0 0
  %746 = vmatpush1.bf16.msra.mxu0 0
  %747 = vmatprep.subr.bf16.mxu0 0
  %748 = vmatpush1.bf16.msra.mxu0 0
  %749 = vmatprep.subr.bf16.mxu0 0
  %750 = vmatpush1.bf16.msra.mxu0 0
  %751 = vmatprep.subr.bf16.mxu0 0
  %752 = vmatpush1.bf16.msra.mxu0 0
  %753 = vmatprep.subr.bf16.mxu0 0
  %754 = vmatpush1.bf16.msra.mxu0 0
  %755 = vmatprep.subr.bf16.mxu0 0
  %756 = vmatpush1.bf16.msra.mxu0 0
  %757 = vmatprep.subr.bf16.mxu0 0
  %758 = vmatpush1.bf16.msra.mxu0 0
  %759 = vmatprep.subr.bf16.mxu0 0
  %760 = vmatpush1.bf16.msra.mxu0 0
  %761 = vmatprep.subr.bf16.mxu0 0
  %762 = vmatpush1.bf16.msra.mxu0 0
  %763 = vmatprep.subr.bf16.mxu0 0
  %764 = vmatpush1.bf16.msra.mxu0 0
  %765 = vmatprep.subr.bf16.mxu0 0
  %766 = vmatpush1.bf16.msra.mxu0 0
  %767 = vmatprep.subr.bf16.mxu0 0
  %768 = vmatpush1.bf16.msra.mxu0 0
  %769 = vmatprep.mubr.bf16.mxu0 0
  %770 = vmatmul.mubr.bf16.gmra.mrb[0].mxu0 %v735
  %v771 = vpop.f32.mrb[0].mxu0
  %v772 = vadd.f32 %v721, %v771
  %v773 = vpop.f32.mrb[0].mxu0
  %v774 = vpop.f32.mrb[0].mxu0
  %v775 = vadd.f32 %v721, %v774
  %v776 = vpop.f32.mrb[0].mxu0
  %777 = vdwg.mxu0
  %778 = vst [vmem:[%s6] sm:$0xff] %v772
  %779 = vst [vmem:[%s6 + $0x8] sm:$0xff] %v775
  // Predicated region
  $region26: #{full_connected_forward.1} parent=0 // pred_check
    _
  $region27: #{full_connected_forward.1} parent=0 // pred_check_branch
    %781 = sbr.rel (0) target = $region29
  $region28: #{full_connected_forward.1} parent=0 // pred_region
    _
  $region29: #{full_connected_forward.1} parent=0 // pred_fallthru
    _
  // Predicated region
  $region30: #{full_connected_forward.1} parent=0 // pred_check
    _
  $region31: #{full_connected_forward.1} parent=0 // pred_check_branch
    %783 = sbr.rel (0) target = $region33
  $region32: #{full_connected_forward.1} parent=0 // pred_region
    _
  $region33: #{full_connected_forward.1} parent=0 // pred_fallthru
    _

</llo_original>
